<compile_context>
chip_gen: v5e
topology: v5e:2x2
jax: 0.10.0
libtpu: 0.0.40
codegen_flags: <defaults>
</compile_context>

<pallas_src>
import jax
import jax.numpy as jnp
from jax.experimental import pallas as pl
from jax.experimental.pallas import tpu as pltpu


def task_specific_kernel(x_ref, wt_ref, b_ref, o_ref):
    # x_ref: (tb, D_in)   wt_ref: (D_in, Cout)   b_ref: (1, Cout) f32
    # o_ref: (tb, Cout)   where Cout is either C (narrow) or Cp=128 (padded).
    x = x_ref[...]
    wt = wt_ref[...]

    # Linear: y = x @ W^T + b  (MXU, f32 accumulation; weight pre-transposed
    # in the wrapper, bias already f32 so no per-step transpose/cast).
    logits = jnp.dot(x, wt, preferred_element_type=jnp.float32) + b_ref[...]

    # Numerically stable log_softmax along the class axis (all f32).
    # In the lane-dense-padded variant the padded classes carry bias = -1e30,
    # so exp(shifted) == 0 for them and they never perturb max or sum.
    m = jnp.max(logits, axis=-1, keepdims=True)
    shifted = logits - m
    lse = jnp.log(jnp.sum(jnp.exp(shifted), axis=-1, keepdims=True))
    o_ref[...] = (shifted - lse).astype(o_ref.dtype)


def prepare_task_specific_params(weight, bias, *, lane_dense_output=False,
                                 param_dtype=None):
    """One-time parameter prep (hoist out of the per-call hot path).

    weight: [C, D_in] (PyTorch Linear layout), bias: [C]
    Returns (w_t, b_row, num_classes):
      narrow (default): w_t [D_in, C],  b_row [1, C] f32
      lane-dense:       w_t [D_in, Cp], b_row [1, Cp] f32 with padded classes
                        zero weight / -1e30 bias (sliced away in the wrapper).
    """
    C, D_in = weight.shape
    dt = param_dtype if param_dtype is not None else weight.dtype
    if lane_dense_output:
        Cp = max(128, pl.cdiv(C, 128) * 128)
        w_t = jnp.zeros((D_in, Cp), dt).at[:, :C].set(weight.T.astype(dt))
        b_row = jnp.full((1, Cp), -1e30, jnp.float32).at[0, :C].set(
            bias.astype(jnp.float32))
    else:
        w_t = weight.T.astype(dt)
        b_row = bias.astype(jnp.float32).reshape(1, C)
    return w_t, b_row, C


def task_specific_forward(h, w_t, b_row, num_classes, *, tile_b=2048,
                          input_dtype=None, output_dtype=None):
    """h: [B, D_in]; (w_t, b_row) from prepare_task_specific_params.
    Returns [B, num_classes] log-probs."""
    B, D_in = h.shape
    Cout = w_t.shape[1]          # C (narrow) or Cp=128 (lane-dense)
    out_dtype = output_dtype if output_dtype is not None else h.dtype

    # Optional reduced-precision streaming of the big operands (MXU still
    # accumulates f32; softmax math stays f32).
    if input_dtype is not None:
        h = h.astype(input_dtype)
        w_t = w_t.astype(input_dtype)

    # Tile sizing: 8-aligned, large (amortize ~0.35us/step), capped at 2048 so
    # double-buffered x/out + f32 temporaries stay far below v5e's 16 MiB
    # scoped VMEM and v7x's 32 MiB scoped VMEM; never larger than the batch.
    tile_b = max(8, min(pl.cdiv(int(tile_b), 8) * 8, 2048))
    tile_b = min(tile_b, max(8, pl.cdiv(B, 8) * 8))
    # For large batches force >= 2 grid steps so the "parallel" batch axis can
    # shard across v7x's two TensorCores.
    if B >= 1024:
        tile_b = min(tile_b, max(8, pl.cdiv(pl.cdiv(B, 2), 8) * 8))

    grid_b = pl.cdiv(B, tile_b)

    out = pl.pallas_call(
        task_specific_kernel,
        out_shape=jax.ShapeDtypeStruct((B, Cout), out_dtype),
        grid_spec=pl.GridSpec(
            grid=(grid_b,),
            in_specs=[
                pl.BlockSpec((tile_b, D_in), lambda i: (i, 0)),  # x tile (streamed)
                pl.BlockSpec((D_in, Cout), lambda i: (0, 0)),    # W^T (resident)
                pl.BlockSpec((1, Cout), lambda i: (0, 0)),       # bias (resident)
            ],
            # Ragged last block handled by Pallas masking: garbage tail-row
            # reads only affect rows whose writes are masked (rows independent).
            out_specs=pl.BlockSpec((tile_b, Cout), lambda i: (i, 0)),
        ),
        compiler_params=pltpu.CompilerParams(
            dimension_semantics=("parallel",),  # batch axis shards across v7x TCs
        ),
    )(h, w_t, b_row)

    # Narrow layout needs no slicing at all; lane-dense layout drops the fake
    # padded classes (their stored values are ~-1e30, harmless).
    if Cout != num_classes:
        out = out[:, :num_classes]
    return out


def task_specific(h, weight, bias, **kwargs):
    """Convenience one-shot API (prefer prepare_* + forward in a hot loop)."""
    prep_kwargs = {}
    if "lane_dense_output" in kwargs:
        prep_kwargs["lane_dense_output"] = kwargs.pop("lane_dense_output")
    if "param_dtype" in kwargs:
        prep_kwargs["param_dtype"] = kwargs.pop("param_dtype")
    w_t, b_row, C = prepare_task_specific_params(weight, bias, **prep_kwargs)
    return task_specific_forward(h, w_t, b_row, C, **kwargs)


if __name__ == "__main__":
    # Module hyper-params (small, consistent with the forward).
    slm_dim_2 = 32
    flm_fl_dim = 16
    num_classes = 10
    d_in = slm_dim_2 + flm_fl_dim * 3      # 80
    batch = 16

    key = jax.random.PRNGKey(0)
    k_h, k_w, k_b, k_h2 = jax.random.split(key, 4)

    # Deterministic synthetic parameters (PyTorch-like uniform init scale).
    bound = 1.0 / (d_in ** 0.5)
    weight = jax.random.uniform(k_w, (num_classes, d_in), jnp.float32, -bound, bound)
    bias = jax.random.uniform(k_b, (num_classes,), jnp.float32, -bound, bound)
    h = jax.random.normal(k_h, (batch, d_in), jnp.float32)

    # Reference (plain JAX).
    ref = jax.nn.log_softmax(h @ weight.T + bias, axis=-1)

    # ---- default path: narrow output, f32, params prepared once ----
    w_t, b_row, C = prepare_task_specific_params(weight, bias)
    out = jax.block_until_ready(task_specific_forward(h, w_t, b_row, C))
    assert out.shape == (batch, num_classes)
    assert jnp.allclose(out, ref, atol=1e-5, rtol=1e-5), "mismatch vs reference (f32)"

    # ---- ragged batch + multi-step grid (partial last block masking) ----
    b2 = 44
    h2 = jax.random.normal(k_h2, (b2, d_in), jnp.float32)
    ref2 = jax.nn.log_softmax(h2 @ weight.T + bias, axis=-1)
    out2 = jax.block_until_ready(task_specific_forward(h2, w_t, b_row, C, tile_b=16))
    assert out2.shape == (b2, num_classes)
    assert jnp.allclose(out2, ref2, atol=1e-5, rtol=1e-5), "mismatch vs reference (ragged)"

    # ---- perf options: lane-dense output + bf16 streaming + bf16 store ----
    w_t_ld, b_row_ld, _ = prepare_task_specific_params(
        weight, bias, lane_dense_output=True, param_dtype=jnp.bfloat16)
    out_ld = jax.block_until_ready(
        task_specific_forward(h, w_t_ld, b_row_ld, C,
                              input_dtype=jnp.bfloat16,
                              output_dtype=jnp.bfloat16))
    assert out_ld.shape == (batch, num_classes)
    assert jnp.allclose(out_ld.astype(jnp.float32), ref, atol=5e-2, rtol=5e-2), \
        "mismatch vs reference (bf16)"

    print("KERNEL_OK")
</pallas_src>

<mosaic_0001>
module attributes {stable_mosaic.version = 11 : i64} {
  func.func @task_specific_kernel(%arg0: i32, %arg1: memref<16x80xf32, #tpu.memory_space<vmem>>, %arg2: memref<80x10xf32, #tpu.memory_space<vmem>>, %arg3: memref<1x10xf32, #tpu.memory_space<vmem>>, %arg4: memref<16x10xf32, #tpu.memory_space<vmem>>) attributes {dimension_semantics = [#tpu.dimension_semantics<parallel>], iteration_bounds = array<i64: 1>, scalar_prefetch = 0 : i64, scratch_operands = 0 : i64, tpu.core_type = #tpu.core_type<tc>, window_params = [{transform_indices = @transform_0, window_bounds = array<i64: 16, 80>}, {pipeline_mode = #tpu.pipeline_mode<synchronous>, transform_indices = @transform_1, window_bounds = array<i64: 80, 10>}, {pipeline_mode = #tpu.pipeline_mode<synchronous>, transform_indices = @transform_2, window_bounds = array<i64: 1, 10>}, {transform_indices = @transform_3, window_bounds = array<i64: 16, 10>}]} {
    %c0 = arith.constant 0 : index
    %c0_0 = arith.constant 0 : index
    %0 = vector.load %arg1[%c0, %c0_0] : memref<16x80xf32, #tpu.memory_space<vmem>>, vector<16x80xf32>
    %c0_1 = arith.constant 0 : index
    %c0_2 = arith.constant 0 : index
    %1 = vector.load %arg2[%c0_1, %c0_2] : memref<80x10xf32, #tpu.memory_space<vmem>>, vector<80x10xf32>
    %cst = arith.constant dense<0.000000e+00> : vector<16x10xf32>
    %2 = tpu.matmul %0, %1, %cst {dimension_numbers = #tpu.dot_dimension_numbers<[1], [0], [0], [1], [0, 0, 1, 1], [], []>} : vector<16x80xf32>, vector<80x10xf32>, vector<16x10xf32> -> vector<16x10xf32>
    %c0_3 = arith.constant 0 : index
    %c0_4 = arith.constant 0 : index
    %3 = vector.load %arg3[%c0_3, %c0_4] : memref<1x10xf32, #tpu.memory_space<vmem>>, vector<1x10xf32>
    %4 = vector.broadcast %3 : vector<1x10xf32> to vector<16x10xf32>
    %5 = arith.addf %2, %4 : vector<16x10xf32>
    %cst_5 = arith.constant dense<0xFF800000> : vector<16xf32>
    %6 = vector.multi_reduction <maximumf>, %5, %cst_5 [1] : vector<16x10xf32> to vector<16xf32>
    %7 = vector.shape_cast %6 : vector<16xf32> to vector<16x1xf32>
    %8 = vector.broadcast %7 : vector<16x1xf32> to vector<16x10xf32>
    %9 = arith.subf %5, %8 : vector<16x10xf32>
    %10 = math.exp %9 : vector<16x10xf32>
    %cst_6 = arith.constant dense<0.000000e+00> : vector<16xf32>
    %11 = vector.multi_reduction <add>, %10, %cst_6 [1] : vector<16x10xf32> to vector<16xf32>
    %12 = vector.shape_cast %11 : vector<16xf32> to vector<16x1xf32>
    %13 = math.log %12 : vector<16x1xf32>
    %14 = vector.broadcast %13 : vector<16x1xf32> to vector<16x10xf32>
    %15 = arith.subf %9, %14 : vector<16x10xf32>
    %c0_7 = arith.constant 0 : index
    %c0_8 = arith.constant 0 : index
    %16 = vector.load %arg4[%c0_7, %c0_8] : memref<16x10xf32, #tpu.memory_space<vmem>>, vector<16x10xf32>
    tpu.vector_store %arg4[%c0_7, %c0_8], %15 {strides = array<i32>} : memref<16x10xf32, #tpu.memory_space<vmem>>, vector<16x10xf32>,
    return
  }
  func.func @transform_0(%arg0: i32) -> (i32, i32) {
    %c0_i32 = arith.constant 0 : i32
    %c0_i32_0 = arith.constant 0 : i32
    return %arg0, %c0_i32 : i32, i32
  }
  func.func @transform_1(%arg0: i32) -> (i32, i32) {
    %c0_i32 = arith.constant 0 : i32
    %c0_i32_0 = arith.constant 0 : i32
    %c0_i32_1 = arith.constant 0 : i32
    return %c0_i32, %c0_i32_0 : i32, i32
  }
  func.func @transform_2(%arg0: i32) -> (i32, i32) {
    %c0_i32 = arith.constant 0 : i32
    %c0_i32_0 = arith.constant 0 : i32
    %c0_i32_1 = arith.constant 0 : i32
    return %c0_i32, %c0_i32_0 : i32, i32
  }
  func.func @transform_3(%arg0: i32) -> (i32, i32) {
    %c0_i32 = arith.constant 0 : i32
    %c0_i32_0 = arith.constant 0 : i32
    return %arg0, %c0_i32 : i32, i32
  }
}

</mosaic_0001>

<llo_original>
// kernel: tpu_custom_call.1
$region0: #{tpu_custom_call.1}
  #allocation0 [shape = 'u32[]', space=smem, size = 0x4, offset = 0x4, fixed_abs, tag = 'smem constant byte address 0x4 - core index']
  #allocation1 [shape = 'u32[72,128]{1,0:T(1,128)}', space=vmem, size = 0x9000, scoped, tag = 'internal scratch']
  %s0 = inlined_call_operand.vmem [shape: f32[16,80], index: 0, kind: input, shape index: {}]
  %s1 = inlined_call_operand.vmem [shape: f32[80,10], index: 1, kind: input, shape index: {}]
  %s2 = inlined_call_operand.vmem [shape: f32[1,10], index: 2, kind: input, shape index: {}]
  %s3 = inlined_call_operand.hbm [shape: f32[16,10], index: 3, kind: output, shape index: {}]
  %s4 = sld [smem:[#allocation0]]
  $region22: #{tpu_custom_call.1} parent=0
    _
  %s6 = ssub.s32 1, %s4
  %s7 = scalar_select 0, %s6, %s4
  $region1: #{tpu_custom_call.1} parent=0
    #allocation2 [shape = 'u8[8192]{0}', space=vmem, size = 0x2000, scoped, tag = 'output window, operand 0, single buffered']
    #allocation3 [shape = 's32[1]{0}', space=sflag, size = 0x4, scoped, tag = 'scoped memory for tpu_custom_call.1']
    %8 = vsyncpa [#allocation3], 0
    // Predicated region
    $region2: #{tpu_custom_call.1} parent=1 // pred_check
      _
    $region3: #{tpu_custom_call.1} parent=1 // pred_check_branch
      %10 = sbr.rel (0) target = $region5
    $region4: #{tpu_custom_call.1} parent=1 // pred_region
      _
    $region5: #{tpu_custom_call.1} parent=1 // pred_fallthru
      _
    // Predicated region
    $region6: #{tpu_custom_call.1} parent=1 // pred_check
      _
    $region7: #{tpu_custom_call.1} parent=1 // pred_check_branch
      %12 = sbr.rel (0) target = $region9
    $region8: #{tpu_custom_call.1} parent=1 // pred_region
      _
    $region9: #{tpu_custom_call.1} parent=1 // pred_fallthru
      _
    // Predicated region
    $region10: #{tpu_custom_call.1} parent=1 // pred_check
      _
    $region11: #{tpu_custom_call.1} parent=1 // pred_check_branch
      %14 = sbr.rel (0) target = $region13
    $region12: #{tpu_custom_call.1} parent=1 // pred_region
      _
    $region13: #{tpu_custom_call.1} parent=1 // pred_fallthru
      _
    %v15 = vld [vmem:[%s0] sm:$0xff]
    %v16 = vld [vmem:[%s0 + $0x8] sm:$0xff]
    %v17 = vld [vmem:[%s1] sm:$0xff]
    %v18 = vld [vmem:[%s1 + $0x8] sm:$0xff]
    %v19 = vld [vmem:[%s1 + $0x10] sm:$0xff]
    %v20 = vld [vmem:[%s1 + $0x18] sm:$0xff]
    %v21 = vld [vmem:[%s1 + $0x20] sm:$0xff]
    %v22 = vld [vmem:[%s1 + $0x28] sm:$0xff]
    %v23 = vld [vmem:[%s1 + $0x30] sm:$0xff]
    %v24 = vld [vmem:[%s1 + $0x38] sm:$0xff]
    %v25 = vld [vmem:[%s1 + $0x40] sm:$0xff]
    %v26 = vld [vmem:[%s1 + $0x48] sm:$0xff]
    %v27 = vld [vmem:[%s2] sm:$0x1]
    %v29 = vperm.slane %v27, 0
    %vm31 = vcmask 654336
    %v33 = vsel %vm31, %v15, 0
    %v36 = vsel %vm31, %v16, 0
    %38 = vmatpush.msra.mxu0 0.0
    %39 = vmatpush.msra.mxu0 0.0
    %40 = vmatpush.msra.mxu0 0.0
    %41 = vmatpush.msra.mxu0 0.0
    %42 = vmatpush.msra.mxu0 0.0
    %43 = vmatpush.msra.mxu0 0.0
    %44 = vmatpush.msra.mxu0 %v26
    %45 = vmatpush.msra.mxu0 %v25
    %46 = vmatpush.msra.mxu0 %v24
    %47 = vmatpush.msra.mxu0 %v23
    %48 = vmatpush.msra.mxu0 %v22
    %49 = vmatpush.msra.mxu0 %v21
    %50 = vmatpush.msra.mxu0 %v20
    %51 = vmatpush.msra.mxu0 %v19
    %52 = vmatpush.msra.mxu0 %v18
    %53 = vmatpush.msra.mxu0 %v17
    %54 = vmatmul.f32.gmra.mxu0 %v33
    %v55 = vpop.f32.mrf.mxu0
    %v56 = vadd.f32 %v29, %v55
    %57 = vmatmul.f32.gmra.mxu0 %v36
    %v58 = vpop.f32.mrf.mxu0
    %v59 = vadd.f32 %v29, %v58
    %60 = vdwg.mxu0
    %vm61 = vcmask 80896
    %v62 = vsel %vm61, %v56, -inf
    %63 = vmax.xlane.f32.xlu0 %v62
    %v64 = vpop.xlane.xlu0 %63
    %v65 = vsel %vm61, %v59, -inf
    %66 = vmax.xlane.f32.xlu0 %v65
    %v67 = vpop.xlane.xlu0 %66
    %v68 = vsub.f32 %v56, %v64
    %v69 = vsub.f32 %v59, %v67
    %v70 = vmul.f32 %v68, 1.442695
    %v71 = vpow.pop %v70
    %v72 = vmul.f32 %v69, 1.442695
    %v73 = vpow.pop %v72
    %v74 = vsel %vm61, %v71, 0.0
    %75 = vadd.xlane.f32.xlu0 %v74
    %v76 = vpop.xlane.xlu0 %75
    %v77 = vsel %vm61, %v73, 0.0
    %78 = vadd.xlane.f32.xlu0 %v77
    %v79 = vpop.xlane.xlu0 %78
    %v80 = vlog2.pop %v76
    %v81 = vmul.f32 %v80, 0.6931472
    %v82 = vlog2.pop %v79
    %v83 = vmul.f32 %v82, 0.6931472
    %v84 = vsub.f32 %v68, %v81
    %v85 = vsub.f32 %v69, %v83
    %86 = vst.msk [vmem:[#allocation2] sm:$0xff] %vm61, %v84
    %87 = vst.msk [vmem:[#allocation2 + $0x8] sm:$0xff] %vm61, %v85
    // Predicated region
    $region14: #{tpu_custom_call.1} parent=1 // pred_check
      _
    $region15: #{tpu_custom_call.1} parent=1 // pred_check_branch
      %89 = sbr.rel (0) target = $region17
    $region16: #{tpu_custom_call.1} parent=1 // pred_region
      %91 = vsyncadd [#allocation3], 0
      %s92 = sshll.u32 [#allocation2], 4
      %s93 = int_to_ptr.vmem [resolvable:$true] %s92
      %s94 = sshll.u32 %s3, 4
      %s95 = int_to_ptr.hbm [resolvable:$true] %s94
      %100 = dma.vmem_to_hbm [thread:$0]  %s93, 256, %s95, [#allocation3], 128, 128, 8
    $region17: #{tpu_custom_call.1} parent=1 // pred_fallthru
      _
    // Predicated region
    $region18: #{tpu_custom_call.1} parent=1 // pred_check
      _
    $region19: #{tpu_custom_call.1} parent=1 // pred_check_branch
      %102 = sbr.rel (0) target = $region21
    $region20: #{tpu_custom_call.1} parent=1 // pred_region
      %104 = dma.done [#allocation3], 256
    $region21: #{tpu_custom_call.1} parent=1 // pred_fallthru
      _
    %105 = vsyncpa [#allocation3], 1

</llo_original>
